<compile_context>
chip_gen: v6e
topology: v6e:2x2x1
jax: 0.10.0
libtpu: 0.0.40
codegen_flags: <defaults>
</compile_context>

<pallas_src>
from functools import partial

import numpy as np
import jax
import jax.numpy as jnp
from jax import lax
from jax.experimental import pallas as pl
from jax.experimental.pallas import tpu as pltpu

_LANE = 128


def _round_up(x, m):
    return (x + m - 1) // m * m


def _vmem_limit_bytes():
    """Scoped-VMEM request: generous on 128 MiB parts, more conservative on 64 MiB (v7x)."""
    try:
        cap = pltpu.get_tpu_info().vmem_capacity_bytes
    except Exception:
        cap = 128 << 20
    return (48 << 20) if cap >= (96 << 20) else (36 << 20)


def _choose_tile(num_v, num_e_pad, in_c, c_pad, vmem_limit):
    """Pick the vertex-tile row count that keeps double-buffered H tiles + residents in VMEM."""
    resident = (c_pad * num_e_pad * 4            # f32 accumulator scratch (pass 1)
                + 2 * c_pad * num_e_pad * 2      # Y^T bf16 (resident output / resident input)
                + 2 * c_pad * in_c * 4           # W
                + 2 * c_pad * 4)                 # bias
    per_row = 2 * (num_e_pad * 2 + in_c * 4 + c_pad * 4)   # H bf16 + X^T col f32 + out row f32
    avail = vmem_limit - resident - (4 << 20)               # headroom for compiler temps
    tv = avail // per_row if avail > 0 else 16
    tv = int(max(16, min(tv, 1024)))
    tv = (tv // 16) * 16                                    # bf16 sublane packing
    tv = min(tv, _round_up(num_v, 16))                      # don't pad tiny graphs up to the cap
    return max(tv, 16)


# --------------------- pass 1: theta + v2e 'mean' + fused edge scaling ---------------------
# Accumulates Y^T-unscaled (c_pad, num_e) = X1^T @ H over vertex tiles, with the per-edge degree
# stats riding along in two spare rows of the same matmul, then applies the fused edge scaling
# (1/d_e) * _De^{-1/2} at finalize.
def _v2e_kernel(out_c, xt_ref, h_ref, w_ref, b_ref, yt_ref, acc_ref):
    c_pad, num_e = acc_ref.shape
    tv = h_ref.shape[0]
    i = pl.program_id(0)

    @pl.when(i == 0)
    def _init():
        acc_ref[...] = jnp.zeros_like(acc_ref)

    h = h_ref[...]                                                       # (tv, E) bf16 0/1 (exact)

    # theta on this vertex tile, in transposed form: X1^T = W @ X^T + b  (f32 MXU, lane-dense N=tv)
    x1t = jnp.dot(w_ref[...], xt_ref[...],
                  preferred_element_type=jnp.float32) + b_ref[...]       # (c_pad, tv)

    # Per-vertex degree of this tile directly in lane layout: 1(1,E) . H_tile^T  (NT contraction,
    # exact f32 MXU accumulation of 0/1 entries; no relayout needed for the row fold below).
    dv_row = lax.dot_general(jnp.ones((1, num_e), jnp.bfloat16), h,
                             dimension_numbers=(((1,), (1,)), ((), ())),
                             preferred_element_type=jnp.float32)         # (1, tv)

    # Fold the two per-edge degree statistics into spare padded rows of the theta LHS so the ONE
    # main matmul also produces them (zero extra MXU / HBM cost):
    #   row c_pad-2 -> sum_{v in e} d_v      row c_pad-1 -> d_e
    # (d_v values are bf16-rounded by the cast below: exact up to degree 256, <=0.2% rel beyond.)
    rows = lax.broadcasted_iota(jnp.int32, (c_pad, tv), 0)
    lhs = jnp.where(rows == c_pad - 2, dv_row, x1t)
    lhs = jnp.where(rows == c_pad - 1, 1.0, lhs)

    # Partial v2e sum: (c_pad, tv) @ (tv, E) in natural NN MXU orientation (bf16 x bf16 -> f32).
    acc_ref[...] += jnp.dot(lhs.astype(jnp.bfloat16), h,
                            preferred_element_type=jnp.float32)

    @pl.when(i == pl.num_programs(0) - 1)
    def _finalize():
        sum_dv = acc_ref[pl.ds(c_pad - 2, 1), :]                         # (1, E)
        d_e = acc_ref[pl.ds(c_pad - 1, 1), :]                            # (1, E)
        inv_de = jnp.where(d_e > 0.0, 1.0 / d_e, 0.0)                    # v2e 'mean'; empty edge -> 0
        de_mean = sum_dv / (d_e + 1.0)            # scatter_reduce 'mean' incl. the initial zero
        s = jnp.where(de_mean > 0.0, lax.rsqrt(de_mean), 1.0)            # _De^-1/2, inf -> 1
        escale = inv_de * s                                              # fused edge-side scaling
        out_rows = lax.broadcasted_iota(jnp.int32, (c_pad, num_e), 0)
        y = jnp.where(out_rows < out_c, acc_ref[...] * escale, 0.0)
        # Plant an all-ones row in Y^T so pass 2's single NT matmul also emits d_v for free.
        y = jnp.where(out_rows == c_pad - 1, 1.0, y)
        yt_ref[...] = y.astype(yt_ref.dtype)


# --------------------- pass 2: e2v 'sum' + D_v^{-1/2} + ReLU -------------------------------
def _e2v_kernel(h_ref, yt_ref, o_ref):
    c_pad = yt_ref.shape[0]
    h = h_ref[...]                                                       # (tv, E) bf16
    # X2_tile = H_tile @ Y  via NT contraction over num_e.  Column c_pad-1 of the result is the
    # per-vertex degree d_v (the all-ones row planted in Y^T) -- no separate degree pass needed.
    x2 = lax.dot_general(h, yt_ref[...],
                         dimension_numbers=(((1,), (1,)), ((), ())),
                         preferred_element_type=jnp.float32)             # (tv, c_pad)
    dv = x2[:, c_pad - 1:c_pad]                                          # (tv, 1) vertex degrees
    dvs = jnp.where(dv > 0.0, lax.rsqrt(dv), 0.0)                        # D_v^-1/2, inf -> 0
    # ReLU; Dropout is the identity at inference.  Lane-dense (c_pad) store.
    o_ref[...] = jnp.maximum(dvs * x2, 0.0).astype(o_ref.dtype)


@jax.jit
def hypergraph_conv(X, H, W, b):
    """X: (num_v, in_c) f32, H: (num_v, num_e) 0/1 incidence, W: (out_c, in_c), b: (out_c,)."""
    num_v, in_c = X.shape
    num_e = H.shape[1]
    out_c = W.shape[0]

    c_pad = _round_up(out_c + 2, _LANE)     # >= out_c + 2 spare rows for the folded degree stats
    num_e_pad = _round_up(num_e, _LANE)     # lane-dense matmul N dim / Y^T store
    vmem_limit = _vmem_limit_bytes()
    tv = _choose_tile(num_v, num_e_pad, in_c, c_pad, vmem_limit)
    num_v_pad = _round_up(num_v, tv)
    nv_tiles = num_v_pad // tv

    # ---- zero padding: padded vertices/edges/channels have zero incidence -> contribute 0 ----
    Xtp = jnp.zeros((in_c, num_v_pad), jnp.float32).at[:, :num_v].set(X.astype(jnp.float32).T)
    Hp = jnp.zeros((num_v_pad, num_e_pad), jnp.bfloat16).at[:num_v, :num_e].set(
        H.astype(jnp.bfloat16))                                          # binary -> exact in bf16
    Wp = jnp.zeros((c_pad, in_c), jnp.float32).at[:out_c, :].set(W.astype(jnp.float32))
    bp = jnp.zeros((c_pad, 1), jnp.float32).at[:out_c, 0].set(b.astype(jnp.float32))

    # ---- pass 1: Y^T = edge_scale * ((X @ W^T + b)^T @ H), reduced over v-tiles ----
    yt = pl.pallas_call(
        partial(_v2e_kernel, out_c),
        out_shape=jax.ShapeDtypeStruct((c_pad, num_e_pad), jnp.bfloat16),
        grid_spec=pltpu.PrefetchScalarGridSpec(
            num_scalar_prefetch=0,
            grid=(nv_tiles,),
            in_specs=[
                pl.BlockSpec((in_c, tv), lambda i: (0, i)),          # X^T tile
                pl.BlockSpec((tv, num_e_pad), lambda i: (i, 0)),     # H tile (bf16, shipped once)
                pl.BlockSpec((c_pad, in_c), lambda i: (0, 0)),       # W (resident)
                pl.BlockSpec((c_pad, 1), lambda i: (0, 0)),          # bias (resident)
            ],
            out_specs=pl.BlockSpec((c_pad, num_e_pad), lambda i: (0, 0)),   # resident Y^T
            scratch_shapes=[pltpu.VMEM((c_pad, num_e_pad), jnp.float32)],   # f32 accumulator
        ),
        compiler_params=pltpu.CompilerParams(
            dimension_semantics=("arbitrary",),       # reduction into a resident output
            vmem_limit_bytes=vmem_limit),
    )(Xtp, Hp, Wp, bp)

    # ---- pass 2: out = ReLU(D_v^{-1/2} * (H @ Y)), parallel over v-tiles ----
    out = pl.pallas_call(
        _e2v_kernel,
        out_shape=jax.ShapeDtypeStruct((num_v_pad, c_pad), jnp.float32),
        grid_spec=pltpu.PrefetchScalarGridSpec(
            num_scalar_prefetch=0,
            grid=(nv_tiles,),
            in_specs=[
                pl.BlockSpec((tv, num_e_pad), lambda i: (i, 0)),     # H tile (bf16)
                pl.BlockSpec((c_pad, num_e_pad), lambda i: (0, 0)),  # Y^T (resident)
            ],
            out_specs=pl.BlockSpec((tv, c_pad), lambda i: (i, 0)),   # lane-dense store
        ),
        compiler_params=pltpu.CompilerParams(
            dimension_semantics=("parallel",),        # v-tiles split across cores on v7x
            vmem_limit_bytes=vmem_limit),
    )(Hp, yt)

    return out[:num_v, :out_c]


def _reference(X, H, W, b):
    # Pure-JAX f32 reference mirroring the PyTorch forward.
    x1 = X @ W.T + b
    d_v = H.sum(axis=1, keepdims=True)
    d_e = H.T.sum(axis=1, keepdims=True)
    y = (H.T @ x1) * jnp.where(d_e > 0, 1.0 / d_e, 0.0)
    de_mean = (H.T @ d_v) / (d_e + 1.0)
    s = jnp.where(de_mean > 0, de_mean ** -0.5, 1.0)
    y = y * s
    x2 = H @ y
    out = jnp.where(d_v > 0, d_v ** -0.5, 0.0) * x2
    return jnp.maximum(out, 0.0)


if __name__ == "__main__":
    num_v, num_e = 64, 32
    in_channels, out_channels = 64, 8

    key = jax.random.PRNGKey(0)
    kx, kh, kw, kb = jax.random.split(key, 4)

    X = jax.random.normal(kx, (num_v, in_channels), dtype=jnp.float32)
    # Dense binary incidence matrix (the hypergraph "HG"): ~25% membership.
    H = (jax.random.uniform(kh, (num_v, num_e)) < 0.25).astype(jnp.float32)

    # Deterministic nn.Linear-style init.
    bound = 1.0 / np.sqrt(in_channels)
    W = jax.random.uniform(kw, (out_channels, in_channels), minval=-bound, maxval=bound,
                           dtype=jnp.float32)
    b = jax.random.uniform(kb, (out_channels,), minval=-bound, maxval=bound,
                           dtype=jnp.float32)

    out = jax.block_until_ready(hypergraph_conv(X, H, W, b))
    ref = _reference(X, H, W, b)

    assert out.shape == (num_v, out_channels)
    # bf16 feature/incidence matmuls (f32 accumulation) -> relaxed tolerance vs the f32 reference.
    np.testing.assert_allclose(np.asarray(out), np.asarray(ref), atol=2e-2, rtol=2e-2)

    print("KERNEL_OK")
</pallas_src>

<mosaic_0001>
module attributes {stable_mosaic.version = 11 : i64} {
  func.func @_v2e_kernel(%arg0: i32, %arg1: memref<64x64xf32, #tpu.memory_space<vmem>>, %arg2: memref<64x128xbf16, #tpu.memory_space<vmem>>, %arg3: memref<128x64xf32, #tpu.memory_space<vmem>>, %arg4: memref<128x1xf32, #tpu.memory_space<vmem>>, %arg5: memref<128x128xbf16, #tpu.memory_space<vmem>>, %arg6: memref<128x128xf32, #tpu.memory_space<vmem>>) attributes {dimension_semantics = [#tpu.dimension_semantics<arbitrary>], iteration_bounds = array<i64: 1>, scalar_prefetch = 0 : i64, scratch_operands = 1 : i64, tpu.core_type = #tpu.core_type<tc>, window_params = [{transform_indices = @transform_0, window_bounds = array<i64: 64, 64>}, {transform_indices = @transform_1, window_bounds = array<i64: 64, 128>}, {pipeline_mode = #tpu.pipeline_mode<synchronous>, transform_indices = @transform_2, window_bounds = array<i64: 128, 64>}, {pipeline_mode = #tpu.pipeline_mode<synchronous>, transform_indices = @transform_3, window_bounds = array<i64: 128, 1>}, {pipeline_mode = #tpu.pipeline_mode<synchronous>, transform_indices = @transform_4, window_bounds = array<i64: 128, 128>}]} {
    %c0_i32 = arith.constant 0 : i32
    %0 = arith.cmpi eq, %arg0, %c0_i32 : i32
    %1 = arith.extui %0 : i1 to i32
    %c0_i32_0 = arith.constant 0 : i32
    %2 = arith.cmpi ne, %1, %c0_i32_0 : i32
    scf.if %2 {
      %cst_18 = arith.constant 0.000000e+00 : f32
      %30 = vector.broadcast %cst_18 : f32 to vector<128x128xf32>
      %c0_19 = arith.constant 0 : index
      %c0_20 = arith.constant 0 : index
      %31 = vector.load %arg6[%c0_19, %c0_20] : memref<128x128xf32, #tpu.memory_space<vmem>>, vector<128x128xf32>
      tpu.vector_store %arg6[%c0_19, %c0_20], %30 {strides = array<i32>} : memref<128x128xf32, #tpu.memory_space<vmem>>, vector<128x128xf32>,
    } else {
    }
    %c0 = arith.constant 0 : index
    %c0_1 = arith.constant 0 : index
    %3 = vector.load %arg2[%c0, %c0_1] : memref<64x128xbf16, #tpu.memory_space<vmem>>, vector<64x128xbf16>
    %c0_2 = arith.constant 0 : index
    %c0_3 = arith.constant 0 : index
    %4 = vector.load %arg3[%c0_2, %c0_3] : memref<128x64xf32, #tpu.memory_space<vmem>>, vector<128x64xf32>
    %c0_4 = arith.constant 0 : index
    %c0_5 = arith.constant 0 : index
    %5 = vector.load %arg1[%c0_4, %c0_5] : memref<64x64xf32, #tpu.memory_space<vmem>>, vector<64x64xf32>
    %cst = arith.constant dense<0.000000e+00> : vector<128x64xf32>
    %6 = tpu.matmul %4, %5, %cst {dimension_numbers = #tpu.dot_dimension_numbers<[1], [0], [0], [1], [0, 0, 1, 1], [], []>} : vector<128x64xf32>, vector<64x64xf32>, vector<128x64xf32> -> vector<128x64xf32>
    %c0_6 = arith.constant 0 : index
    %c0_7 = arith.constant 0 : index
    %7 = vector.load %arg4[%c0_6, %c0_7] : memref<128x1xf32, #tpu.memory_space<vmem>>, vector<128x1xf32>
    %8 = vector.broadcast %7 : vector<128x1xf32> to vector<128x64xf32>
    %9 = arith.addf %6, %8 : vector<128x64xf32>
    %cst_8 = arith.constant 1.000000e+00 : bf16
    %10 = vector.broadcast %cst_8 : bf16 to vector<1x128xbf16>
    %cst_9 = arith.constant dense<0.000000e+00> : vector<1x64xf32>
    %11 = tpu.matmul %10, %3, %cst_9 {dimension_numbers = #tpu.dot_dimension_numbers<[1], [1], [0], [0], [0, 0, 1, 0], [], []>} : vector<1x128xbf16>, vector<64x128xbf16>, vector<1x64xf32> -> vector<1x64xf32>
    %12 = tpu.iota {dimensions = array<i32: 0>} : vector<128x64xi32>
    %c126_i32 = arith.constant 126 : i32
    %13 = vector.broadcast %c126_i32 : i32 to vector<128x64xi32>
    %14 = arith.cmpi eq, %12, %13 : vector<128x64xi32>
    %15 = vector.shape_cast %11 : vector<1x64xf32> to vector<1x64xf32>
    %16 = vector.broadcast %15 : vector<1x64xf32> to vector<128x64xf32>
    %17 = arith.select %14, %16, %9 : vector<128x64xi1>, vector<128x64xf32>
    %c127_i32 = arith.constant 127 : i32
    %18 = vector.broadcast %c127_i32 : i32 to vector<128x64xi32>
    %19 = arith.cmpi eq, %12, %18 : vector<128x64xi32>
    %cst_10 = arith.constant 1.000000e+00 : f32
    %20 = vector.broadcast %cst_10 : f32 to vector<128x64xf32>
    %21 = arith.select %19, %20, %17 : vector<128x64xi1>, vector<128x64xf32>
    %c0_11 = arith.constant 0 : index
    %c0_12 = arith.constant 0 : index
    %22 = vector.load %arg6[%c0_11, %c0_12] : memref<128x128xf32, #tpu.memory_space<vmem>>, vector<128x128xf32>
    %23 = arith.truncf %21 : vector<128x64xf32> to vector<128x64xbf16>
    %cst_13 = arith.constant dense<0.000000e+00> : vector<128x128xf32>
    %24 = tpu.matmul %23, %3, %cst_13 {dimension_numbers = #tpu.dot_dimension_numbers<[1], [0], [0], [1], [0, 0, 1, 1], [], []>} : vector<128x64xbf16>, vector<64x128xbf16>, vector<128x128xf32> -> vector<128x128xf32>
    %25 = arith.addf %22, %24 : vector<128x128xf32>
    %c0_14 = arith.constant 0 : index
    %c0_15 = arith.constant 0 : index
    %26 = vector.load %arg6[%c0_14, %c0_15] : memref<128x128xf32, #tpu.memory_space<vmem>>, vector<128x128xf32>
    tpu.vector_store %arg6[%c0_14, %c0_15], %25 {strides = array<i32>} : memref<128x128xf32, #tpu.memory_space<vmem>>, vector<128x128xf32>,
    %c0_i32_16 = arith.constant 0 : i32
    %27 = arith.cmpi eq, %arg0, %c0_i32_16 : i32
    %28 = arith.extui %27 : i1 to i32
    %c0_i32_17 = arith.constant 0 : i32
    %29 = arith.cmpi ne, %28, %c0_i32_17 : i32
    scf.if %29 {
      %c126 = arith.constant 126 : index
      %c0_18 = arith.constant 0 : index
      %30 = vector.load %arg6[%c126, %c0_18] : memref<128x128xf32, #tpu.memory_space<vmem>>, vector<1x128xf32>
      %c127 = arith.constant 127 : index
      %c0_19 = arith.constant 0 : index
      %31 = vector.load %arg6[%c127, %c0_19] : memref<128x128xf32, #tpu.memory_space<vmem>>, vector<1x128xf32>
      %cst_20 = arith.constant 0.000000e+00 : f32
      %32 = vector.broadcast %cst_20 : f32 to vector<1x128xf32>
      %33 = arith.cmpf ogt, %31, %32 : vector<1x128xf32>
      %cst_21 = arith.constant 1.000000e+00 : f32
      %34 = vector.broadcast %cst_21 : f32 to vector<1x128xf32>
      %35 = arith.divf %34, %31 : vector<1x128xf32>
      %cst_22 = arith.constant 0.000000e+00 : f32
      %36 = vector.broadcast %cst_22 : f32 to vector<1x128xf32>
      %37 = arith.select %33, %35, %36 : vector<1x128xi1>, vector<1x128xf32>
      %cst_23 = arith.constant 1.000000e+00 : f32
      %38 = vector.broadcast %cst_23 : f32 to vector<1x128xf32>
      %39 = arith.addf %31, %38 : vector<1x128xf32>
      %40 = arith.divf %30, %39 : vector<1x128xf32>
      %cst_24 = arith.constant 0.000000e+00 : f32
      %41 = vector.broadcast %cst_24 : f32 to vector<1x128xf32>
      %42 = arith.cmpf ogt, %40, %41 : vector<1x128xf32>
      %43 = math.rsqrt %40 : vector<1x128xf32>
      %cst_25 = arith.constant 1.000000e+00 : f32
      %44 = vector.broadcast %cst_25 : f32 to vector<1x128xf32>
      %45 = arith.select %42, %43, %44 : vector<1x128xi1>, vector<1x128xf32>
      %46 = arith.mulf %37, %45 : vector<1x128xf32>
      %47 = tpu.iota {dimensions = array<i32: 0>} : vector<128x128xi32>
      %c8_i32 = arith.constant 8 : i32
      %48 = vector.broadcast %c8_i32 : i32 to vector<128x128xi32>
      %49 = arith.cmpi slt, %47, %48 : vector<128x128xi32>
      %c0_26 = arith.constant 0 : index
      %c0_27 = arith.constant 0 : index
      %50 = vector.load %arg6[%c0_26, %c0_27] : memref<128x128xf32, #tpu.memory_space<vmem>>, vector<128x128xf32>
      %51 = vector.broadcast %46 : vector<1x128xf32> to vector<128x128xf32>
      %52 = arith.mulf %50, %51 : vector<128x128xf32>
      %cst_28 = arith.constant 0.000000e+00 : f32
      %53 = vector.broadcast %cst_28 : f32 to vector<128x128xf32>
      %54 = arith.select %49, %52, %53 : vector<128x128xi1>, vector<128x128xf32>
      %c127_i32_29 = arith.constant 127 : i32
      %55 = vector.broadcast %c127_i32_29 : i32 to vector<128x128xi32>
      %56 = arith.cmpi eq, %47, %55 : vector<128x128xi32>
      %cst_30 = arith.constant 1.000000e+00 : f32
      %57 = vector.broadcast %cst_30 : f32 to vector<128x128xf32>
      %58 = arith.select %56, %57, %54 : vector<128x128xi1>, vector<128x128xf32>
      %59 = arith.truncf %58 : vector<128x128xf32> to vector<128x128xbf16>
      %c0_31 = arith.constant 0 : index
      %c0_32 = arith.constant 0 : index
      %60 = vector.load %arg5[%c0_31, %c0_32] : memref<128x128xbf16, #tpu.memory_space<vmem>>, vector<128x128xbf16>
      tpu.vector_store %arg5[%c0_31, %c0_32], %59 {strides = array<i32>} : memref<128x128xbf16, #tpu.memory_space<vmem>>, vector<128x128xbf16>,
    } else {
    }
    return
  }
  func.func @transform_0(%arg0: i32) -> (i32, i32) {
    %c0_i32 = arith.constant 0 : i32
    %c0_i32_0 = arith.constant 0 : i32
    return %c0_i32, %arg0 : i32, i32
  }
  func.func @transform_1(%arg0: i32) -> (i32, i32) {
    %c0_i32 = arith.constant 0 : i32
    %c0_i32_0 = arith.constant 0 : i32
    return %arg0, %c0_i32 : i32, i32
  }
  func.func @transform_2(%arg0: i32) -> (i32, i32) {
    %c0_i32 = arith.constant 0 : i32
    %c0_i32_0 = arith.constant 0 : i32
    %c0_i32_1 = arith.constant 0 : i32
    return %c0_i32, %c0_i32_0 : i32, i32
  }
  func.func @transform_3(%arg0: i32) -> (i32, i32) {
    %c0_i32 = arith.constant 0 : i32
    %c0_i32_0 = arith.constant 0 : i32
    %c0_i32_1 = arith.constant 0 : i32
    return %c0_i32, %c0_i32_0 : i32, i32
  }
  func.func @transform_4(%arg0: i32) -> (i32, i32) {
    %c0_i32 = arith.constant 0 : i32
    %c0_i32_0 = arith.constant 0 : i32
    %c0_i32_1 = arith.constant 0 : i32
    return %c0_i32, %c0_i32_0 : i32, i32
  }
}

module attributes {stable_mosaic.version = 11 : i64} {
  func.func @_e2v_kernel(%arg0: i32, %arg1: memref<64x128xbf16, #tpu.memory_space<vmem>>, %arg2: memref<128x128xbf16, #tpu.memory_space<vmem>>, %arg3: memref<64x128xf32, #tpu.memory_space<vmem>>) attributes {dimension_semantics = [#tpu.dimension_semantics<parallel>], iteration_bounds = array<i64: 1>, scalar_prefetch = 0 : i64, scratch_operands = 0 : i64, tpu.core_type = #tpu.core_type<tc>, window_params = [{transform_indices = @transform_0, window_bounds = array<i64: 64, 128>}, {pipeline_mode = #tpu.pipeline_mode<synchronous>, transform_indices = @transform_1, window_bounds = array<i64: 128, 128>}, {transform_indices = @transform_2, window_bounds = array<i64: 64, 128>}]} {
    %c0 = arith.constant 0 : index
    %c0_0 = arith.constant 0 : index
    %0 = vector.load %arg1[%c0, %c0_0] : memref<64x128xbf16, #tpu.memory_space<vmem>>, vector<64x128xbf16>
    %c0_1 = arith.constant 0 : index
    %c0_2 = arith.constant 0 : index
    %1 = vector.load %arg2[%c0_1, %c0_2] : memref<128x128xbf16, #tpu.memory_space<vmem>>, vector<128x128xbf16>
    %cst = arith.constant dense<0.000000e+00> : vector<64x128xf32>
    %2 = tpu.matmul %0, %1, %cst {dimension_numbers = #tpu.dot_dimension_numbers<[1], [1], [0], [0], [0, 0, 1, 0], [], []>} : vector<64x128xbf16>, vector<128x128xbf16>, vector<64x128xf32> -> vector<64x128xf32>
    %3 = vector.extract_strided_slice %2 {offsets = [0, 127], sizes = [64, 1], strides = [1, 1]} : vector<64x128xf32> to vector<64x1xf32>
    %cst_3 = arith.constant 0.000000e+00 : f32
    %4 = vector.broadcast %cst_3 : f32 to vector<64x1xf32>
    %5 = arith.cmpf ogt, %3, %4 : vector<64x1xf32>
    %6 = math.rsqrt %3 : vector<64x1xf32>
    %cst_4 = arith.constant 0.000000e+00 : f32
    %7 = vector.broadcast %cst_4 : f32 to vector<64x1xf32>
    %8 = arith.select %5, %6, %7 : vector<64x1xi1>, vector<64x1xf32>
    %9 = vector.broadcast %8 : vector<64x1xf32> to vector<64x128xf32>
    %10 = arith.mulf %9, %2 : vector<64x128xf32>
    %cst_5 = arith.constant 0.000000e+00 : f32
    %11 = vector.broadcast %cst_5 : f32 to vector<64x128xf32>
    %12 = arith.maximumf %10, %11 : vector<64x128xf32>
    %c0_6 = arith.constant 0 : index
    %c0_7 = arith.constant 0 : index
    %13 = vector.load %arg3[%c0_6, %c0_7] : memref<64x128xf32, #tpu.memory_space<vmem>>, vector<64x128xf32>
    tpu.vector_store %arg3[%c0_6, %c0_7], %12 {strides = array<i32>} : memref<64x128xf32, #tpu.memory_space<vmem>>, vector<64x128xf32>,
    return
  }
  func.func @transform_0(%arg0: i32) -> (i32, i32) {
    %c0_i32 = arith.constant 0 : i32
    %c0_i32_0 = arith.constant 0 : i32
    return %arg0, %c0_i32 : i32, i32
  }
  func.func @transform_1(%arg0: i32) -> (i32, i32) {
    %c0_i32 = arith.constant 0 : i32
    %c0_i32_0 = arith.constant 0 : i32
    %c0_i32_1 = arith.constant 0 : i32
    return %c0_i32, %c0_i32_0 : i32, i32
  }
  func.func @transform_2(%arg0: i32) -> (i32, i32) {
    %c0_i32 = arith.constant 0 : i32
    %c0_i32_0 = arith.constant 0 : i32
    return %arg0, %c0_i32 : i32, i32
  }
}

</mosaic_0001>

<llo_original>
// kernel: hypergraph_conv.3
$region0: #{hypergraph_conv.3}
  #allocation0 [shape = 'u32[]', space=smem, size = 0x4, offset = 0x4, fixed_abs, tag = 'smem constant byte address 0x4 - core index']
  #allocation1 [shape = 'u32[144,128]{1,0:T(1,128)}', space=vmem, size = 0x12000, scoped, tag = 'internal scratch']
  %s0 = inlined_call_operand.vmem [shape: bf16[64,128], index: 0, kind: input, shape index: {}]
  %s1 = inlined_call_operand.vmem [shape: bf16[128,128], index: 1, kind: input, shape index: {}]
  %s2 = inlined_call_operand.vmem [shape: f32[64,128], index: 2, kind: output, shape index: {}]
  %s3 = sld [smem:[#allocation0]]
  $region18: #{hypergraph_conv.3} parent=0
    _
  %s5 = ssub.s32 1, %s3
  %s6 = scalar_select 0, %s5, %s3
  // Predicated region
  $region2: #{hypergraph_conv.3} parent=0 // pred_check
    _
  $region3: #{hypergraph_conv.3} parent=0 // pred_check_branch
    %8 = sbr.rel (0) target = $region5
  $region4: #{hypergraph_conv.3} parent=0 // pred_region
    _
  $region5: #{hypergraph_conv.3} parent=0 // pred_fallthru
    _
  // Predicated region
  $region6: #{hypergraph_conv.3} parent=0 // pred_check
    _
  $region7: #{hypergraph_conv.3} parent=0 // pred_check_branch
    %10 = sbr.rel (0) target = $region9
  $region8: #{hypergraph_conv.3} parent=0 // pred_region
    _
  $region9: #{hypergraph_conv.3} parent=0 // pred_fallthru
    _
  %v12 = vld [vmem:[%s0] sm:$0xf]
  %v13 = vld [vmem:[%s0 + $0x4] sm:$0xf]
  %v14 = vld [vmem:[%s0 + $0x8] sm:$0xf]
  %v15 = vld [vmem:[%s0 + $0xc] sm:$0xf]
  %v16 = vld [vmem:[%s0 + $0x10] sm:$0xf]
  %v17 = vld [vmem:[%s0 + $0x14] sm:$0xf]
  %v18 = vld [vmem:[%s0 + $0x18] sm:$0xf]
  %v19 = vld [vmem:[%s0 + $0x1c] sm:$0xf]
  %v20 = vld [vmem:[%s1] sm:$0xf]
  %v21 = vld [vmem:[%s1 + $0x4] sm:$0xf]
  %v22 = vld [vmem:[%s1 + $0x8] sm:$0xf]
  %v23 = vld [vmem:[%s1 + $0xc] sm:$0xf]
  %v24 = vld [vmem:[%s1 + $0x10] sm:$0xf]
  %v25 = vld [vmem:[%s1 + $0x14] sm:$0xf]
  %v26 = vld [vmem:[%s1 + $0x18] sm:$0xf]
  %v27 = vld [vmem:[%s1 + $0x1c] sm:$0xf]
  %v28 = vld [vmem:[%s1 + $0x20] sm:$0xf]
  %v29 = vld [vmem:[%s1 + $0x24] sm:$0xf]
  %v30 = vld [vmem:[%s1 + $0x28] sm:$0xf]
  %v31 = vld [vmem:[%s1 + $0x2c] sm:$0xf]
  %v32 = vld [vmem:[%s1 + $0x30] sm:$0xf]
  %v33 = vld [vmem:[%s1 + $0x34] sm:$0xf]
  %v34 = vld [vmem:[%s1 + $0x38] sm:$0xf]
  %v35 = vld [vmem:[%s1 + $0x3c] sm:$0xf]
  %v44 = vunpack.c.l.b16 %v12
  %v45 = vunpack.c.l.b16 %v13
  %v46 = vunpack.c.l.b16 %v14
  %v47 = vunpack.c.l.b16 %v15
  %v48 = vunpack.c.l.b16 %v16
  %v49 = vunpack.c.l.b16 %v17
  %v50 = vunpack.c.l.b16 %v18
  %v51 = vunpack.c.l.b16 %v19
  %v52 = vpack.c.b16 %v45, %v44
  %v53 = vpack.c.b16 %v47, %v46
  %v54 = vpack.c.b16 %v49, %v48
  %v55 = vpack.c.b16 %v51, %v50
  %v76 = vunpack.c.l.b16 %v20
  %v77 = vunpack.c.l.b16 %v21
  %v78 = vunpack.c.l.b16 %v22
  %v79 = vunpack.c.l.b16 %v23
  %v80 = vunpack.c.l.b16 %v24
  %v81 = vunpack.c.l.b16 %v25
  %v82 = vunpack.c.l.b16 %v26
  %v83 = vunpack.c.l.b16 %v27
  %v84 = vunpack.c.l.b16 %v28
  %v85 = vunpack.c.l.b16 %v29
  %v86 = vunpack.c.l.b16 %v30
  %v87 = vunpack.c.l.b16 %v31
  %v88 = vunpack.c.l.b16 %v32
  %v89 = vunpack.c.l.b16 %v33
  %v90 = vunpack.c.l.b16 %v34
  %v91 = vunpack.c.l.b16 %v35
  %v92 = vpack.c.b16 %v77, %v76
  %v93 = vpack.c.b16 %v79, %v78
  %v94 = vpack.c.b16 %v81, %v80
  %v95 = vpack.c.b16 %v83, %v82
  %v96 = vpack.c.b16 %v85, %v84
  %v97 = vpack.c.b16 %v87, %v86
  %v98 = vpack.c.b16 %v89, %v88
  %v99 = vpack.c.b16 %v91, %v90
  %108 = vmatprep.subr.bf16.mxu0 0
  %109 = vmatpush1.bf16.xpose.msra.mxu0 %v99
  %110 = vmatprep.subr.bf16.mxu0 0
  %111 = vmatpush1.bf16.xpose.msra.mxu0 %v98
  %112 = vmatprep.subr.bf16.mxu0 0
  %113 = vmatpush1.bf16.xpose.msra.mxu0 %v97
  %114 = vmatprep.subr.bf16.mxu0 0
  %115 = vmatpush1.bf16.xpose.msra.mxu0 %v96
  %116 = vmatprep.subr.bf16.mxu0 0
  %117 = vmatpush1.bf16.xpose.msra.mxu0 %v95
  %118 = vmatprep.subr.bf16.mxu0 0
  %119 = vmatpush1.bf16.xpose.msra.mxu0 %v94
  %120 = vmatprep.subr.bf16.mxu0 0
  %121 = vmatpush1.bf16.xpose.msra.mxu0 %v93
  %122 = vmatprep.subr.bf16.mxu0 0
  %123 = vmatpush1.bf16.xpose.msra.mxu0 %v92
  %124 = vmatprep.subr.bf16.mxu0 0
  %125 = vmatpush2.bf16.xpose.msra.mxu0 0
  %126 = vmatprep.subr.bf16.mxu0 0
  %127 = vmatpush2.bf16.xpose.msra.mxu0 0
  %128 = vmatprep.subr.bf16.mxu0 0
  %129 = vmatpush2.bf16.xpose.msra.mxu0 0
  %130 = vmatprep.subr.bf16.mxu0 0
  %131 = vmatpush2.bf16.xpose.msra.mxu0 0
  %132 = vmatprep.subr.bf16.mxu0 0
  %133 = vmatpush2.bf16.xpose.msra.mxu0 0
  %134 = vmatprep.subr.bf16.mxu0 0
  %135 = vmatpush2.bf16.xpose.msra.mxu0 0
  %136 = vmatprep.subr.bf16.mxu0 0
  %137 = vmatpush2.bf16.xpose.msra.mxu0 0
  %138 = vmatprep.subr.bf16.mxu0 0
  %139 = vmatpush2.bf16.xpose.msra.mxu0 0
  %140 = vmatprep.mubr.bf16.mxu0 0
  %141 = vmatmul.mubr.bf16.gmra.mxu0 %v52
  %v142 = vpop.f32.mrf.mxu0
  %v143 = vadd.f32 0.0, %v142
  %v144 = vpop.f32.mrf.mxu0
  %v145 = vpop.f32.mrf.mxu0
  %v146 = vadd.f32 0.0, %v145
  %v147 = vpop.f32.mrf.mxu0
  %148 = vmatprep.mubr.bf16.mxu0 0
  %149 = vmatmul.mubr.bf16.gmra.mxu0 %v53
  %v150 = vpop.f32.mrf.mxu0
  %v151 = vadd.f32 0.0, %v150
  %v152 = vpop.f32.mrf.mxu0
  %v153 = vpop.f32.mrf.mxu0
  %v154 = vadd.f32 0.0, %v153
  %v155 = vpop.f32.mrf.mxu0
  %156 = vmatprep.mubr.bf16.mxu0 0
  %157 = vmatmul.mubr.bf16.gmra.mxu0 %v54
  %v158 = vpop.f32.mrf.mxu0
  %v159 = vadd.f32 0.0, %v158
  %v160 = vpop.f32.mrf.mxu0
  %v161 = vpop.f32.mrf.mxu0
  %v162 = vadd.f32 0.0, %v161
  %v163 = vpop.f32.mrf.mxu0
  %164 = vmatprep.mubr.bf16.mxu0 0
  %165 = vmatmul.mubr.bf16.gmra.mxu0 %v55
  %v166 = vpop.f32.mrf.mxu0
  %v167 = vadd.f32 0.0, %v166
  %v168 = vpop.f32.mrf.mxu0
  %v169 = vpop.f32.mrf.mxu0
  %v170 = vadd.f32 0.0, %v169
  %v171 = vpop.f32.mrf.mxu0
  %172 = vdwg.mxu0
  %vm173 = vcmp.gt.f32.partialorder %v143, 0.0
  %vm174 = vcmp.gt.f32.partialorder %v146, 0.0
  %vm175 = vcmp.gt.f32.partialorder %v151, 0.0
  %vm176 = vcmp.gt.f32.partialorder %v154, 0.0
  %vm177 = vcmp.gt.f32.partialorder %v159, 0.0
  %vm178 = vcmp.gt.f32.partialorder %v162, 0.0
  %vm179 = vcmp.gt.f32.partialorder %v167, 0.0
  %vm180 = vcmp.gt.f32.partialorder %v170, 0.0
  %v181 = vrsqrt.pop %v143
  %v182 = vrsqrt.pop %v146
  %v183 = vrsqrt.pop %v151
  %v184 = vrsqrt.pop %v154
  %v185 = vrsqrt.pop %v159
  %v186 = vrsqrt.pop %v162
  %v187 = vrsqrt.pop %v167
  %v188 = vrsqrt.pop %v170
  %v189 = vsel %vm173, %v181, 0.0
  %v190 = vsel %vm174, %v182, 0.0
  %v191 = vsel %vm175, %v183, 0.0
  %v192 = vsel %vm176, %v184, 0.0
  %v193 = vsel %vm177, %v185, 0.0
  %v194 = vsel %vm178, %v186, 0.0
  %v195 = vsel %vm179, %v187, 0.0
  %v196 = vsel %vm180, %v188, 0.0
  %198 = vset.pattern.permute.xlu0 127
  %199 = vperm.xlu0 %198, %v189
  %v200 = vpop.permute.xlu0 %199
  %203 = vset.pattern.permute.xlu0 127
  %204 = vperm.xlu0 %203, %v190
  %v205 = vpop.permute.xlu0 %204
  %208 = vset.pattern.permute.xlu0 127
  %209 = vperm.xlu0 %208, %v191
  %v210 = vpop.permute.xlu0 %209
  %213 = vset.pattern.permute.xlu0 127
  %214 = vperm.xlu0 %213, %v192
  %v215 = vpop.permute.xlu0 %214
  %218 = vset.pattern.permute.xlu0 127
  %219 = vperm.xlu0 %218, %v193
  %v220 = vpop.permute.xlu0 %219
  %223 = vset.pattern.permute.xlu0 127
  %224 = vperm.xlu0 %223, %v194
  %v225 = vpop.permute.xlu0 %224
  %228 = vset.pattern.permute.xlu0 127
  %229 = vperm.xlu0 %228, %v195
  %v230 = vpop.permute.xlu0 %229
  %233 = vset.pattern.permute.xlu0 127
  %234 = vperm.xlu0 %233, %v196
  %v235 = vpop.permute.xlu0 %234
  %v237 = vmul.f32 %v200, %v143
  %v238 = vmul.f32 %v205, %v146
  %v239 = vmul.f32 %v210, %v151
  %v240 = vmul.f32 %v215, %v154
  %v241 = vmul.f32 %v220, %v159
  %v242 = vmul.f32 %v225, %v162
  %v243 = vmul.f32 %v230, %v167
  %v244 = vmul.f32 %v235, %v170
  %v245 = vmax.f32 %v237, 0.0
  %v246 = vmax.f32 %v238, 0.0
  %v247 = vmax.f32 %v239, 0.0
  %v248 = vmax.f32 %v240, 0.0
  %v249 = vmax.f32 %v241, 0.0
  %v250 = vmax.f32 %v242, 0.0
  %v251 = vmax.f32 %v243, 0.0
  %v252 = vmax.f32 %v244, 0.0
  %253 = vst [vmem:[%s2] sm:$0xff] %v245
  %254 = vst [vmem:[%s2 + $0x8] sm:$0xff] %v246
  %255 = vst [vmem:[%s2 + $0x10] sm:$0xff] %v247
  %256 = vst [vmem:[%s2 + $0x18] sm:$0xff] %v248
  %257 = vst [vmem:[%s2 + $0x20] sm:$0xff] %v249
  %258 = vst [vmem:[%s2 + $0x28] sm:$0xff] %v250
  %259 = vst [vmem:[%s2 + $0x30] sm:$0xff] %v251
  %260 = vst [vmem:[%s2 + $0x38] sm:$0xff] %v252
  // Predicated region
  $region10: #{hypergraph_conv.3} parent=0 // pred_check
    _
  $region11: #{hypergraph_conv.3} parent=0 // pred_check_branch
    %262 = sbr.rel (0) target = $region13
  $region12: #{hypergraph_conv.3} parent=0 // pred_region
    _
  $region13: #{hypergraph_conv.3} parent=0 // pred_fallthru
    _
  // Predicated region
  $region14: #{hypergraph_conv.3} parent=0 // pred_check
    _
  $region15: #{hypergraph_conv.3} parent=0 // pred_check_branch
    %264 = sbr.rel (0) target = $region17
  $region16: #{hypergraph_conv.3} parent=0 // pred_region
    _
  $region17: #{hypergraph_conv.3} parent=0 // pred_fallthru
    _

// kernel: hypergraph_conv.2
$region0: #{hypergraph_conv.2}
  #allocation0 [shape = 'u32[]', space=smem, size = 0x4, offset = 0x4, fixed_abs, tag = 'smem constant byte address 0x4 - core index']
  #allocation1 [shape = 'u32[144,128]{1,0:T(1,128)}', space=vmem, size = 0x12000, scoped, tag = 'internal scratch']
  #allocation2 [shape = 'f32[128,128]{1,0:T(8,128)}', space=vmem, size = 0x10000, scoped, tag = 'scratch operand']
  %s0 = inlined_call_operand.vmem [shape: f32[64,64], index: 0, kind: input, shape index: {}]
  %s1 = inlined_call_operand.vmem [shape: bf16[64,128], index: 1, kind: input, shape index: {}]
  %s2 = inlined_call_operand.vmem [shape: f32[128,64], index: 2, kind: input, shape index: {}]
  %s3 = inlined_call_operand.vmem [shape: f32[128,1], index: 3, kind: input, shape index: {}]
  %s4 = inlined_call_operand.vmem [shape: bf16[128,128], index: 4, kind: output, shape index: {}]
  %s5 = sld [smem:[#allocation0]]
  $region34: #{hypergraph_conv.2} parent=0
    _
  %s7 = ssub.s32 1, %s5
  %s8 = scalar_select 0, %s7, %s5
  // Predicated region
  $region2: #{hypergraph_conv.2} parent=0 // pred_check
    _
  $region3: #{hypergraph_conv.2} parent=0 // pred_check_branch
    %10 = sbr.rel (0) target = $region5
  $region4: #{hypergraph_conv.2} parent=0 // pred_region
    _
  $region5: #{hypergraph_conv.2} parent=0 // pred_fallthru
    _
  // Predicated region
  $region6: #{hypergraph_conv.2} parent=0 // pred_check
    _
  $region7: #{hypergraph_conv.2} parent=0 // pred_check_branch
    %12 = sbr.rel (0) target = $region9
  $region8: #{hypergraph_conv.2} parent=0 // pred_region
    _
  $region9: #{hypergraph_conv.2} parent=0 // pred_fallthru
    _
  // Predicated region
  $region10: #{hypergraph_conv.2} parent=0 // pred_check
    _
  $region11: #{hypergraph_conv.2} parent=0 // pred_check_branch
    %14 = sbr.rel (0) target = $region13
  $region12: #{hypergraph_conv.2} parent=0 // pred_region
    _
  $region13: #{hypergraph_conv.2} parent=0 // pred_fallthru
    _
  // Predicated region
  $region14: #{hypergraph_conv.2} parent=0 // pred_check
    _
  $region15: #{hypergraph_conv.2} parent=0 // pred_check_branch
    %16 = sbr.rel (0) target = $region17
  $region16: #{hypergraph_conv.2} parent=0 // pred_region
    _
  $region17: #{hypergraph_conv.2} parent=0 // pred_fallthru
    _
  %p19 = scmp.eq.s32.totalorder 0, 0
  // Predicated region
  $region18: #{hypergraph_conv.2} parent=0 // pred_check
    %p20 = pneg %p19
  $region19: #{hypergraph_conv.2} parent=0 // pred_check_branch
    %22 = sbr.rel (%p20) target = $region21
  $region20: #{hypergraph_conv.2} parent=0 // pred_region
    %23 = vst [vmem:[#allocation2] sm:$0xff] 0.0
    %24 = vst [vmem:[#allocation2 + $0x8] sm:$0xff] 0.0
    %25 = vst [vmem:[#allocation2 + $0x10] sm:$0xff] 0.0
    %26 = vst [vmem:[#allocation2 + $0x18] sm:$0xff] 0.0
    %27 = vst [vmem:[#allocation2 + $0x20] sm:$0xff] 0.0
    %28 = vst [vmem:[#allocation2 + $0x28] sm:$0xff] 0.0
    %29 = vst [vmem:[#allocation2 + $0x30] sm:$0xff] 0.0
    %30 = vst [vmem:[#allocation2 + $0x38] sm:$0xff] 0.0
    %31 = vst [vmem:[#allocation2 + $0x40] sm:$0xff] 0.0
    %32 = vst [vmem:[#allocation2 + $0x48] sm:$0xff] 0.0
    %33 = vst [vmem:[#allocation2 + $0x50] sm:$0xff] 0.0
    %34 = vst [vmem:[#allocation2 + $0x58] sm:$0xff] 0.0
    %35 = vst [vmem:[#allocation2 + $0x60] sm:$0xff] 0.0
    %36 = vst [vmem:[#allocation2 + $0x68] sm:$0xff] 0.0
    %37 = vst [vmem:[#allocation2 + $0x70] sm:$0xff] 0.0
    %38 = vst [vmem:[#allocation2 + $0x78] sm:$0xff] 0.0
  $region21: #{hypergraph_conv.2} parent=0 // pred_fallthru
    _
  %v39 = vld [vmem:[%s1] sm:$0xf]
  %v40 = vld [vmem:[%s1 + $0x4] sm:$0xf]
  %v41 = vld [vmem:[%s1 + $0x8] sm:$0xf]
  %v42 = vld [vmem:[%s1 + $0xc] sm:$0xf]
  %v43 = vld [vmem:[%s1 + $0x10] sm:$0xf]
  %v44 = vld [vmem:[%s1 + $0x14] sm:$0xf]
  %v45 = vld [vmem:[%s1 + $0x18] sm:$0xf]
  %v46 = vld [vmem:[%s1 + $0x1c] sm:$0xf]
  %v47 = vld [vmem:[%s2] sm:$0xff]
  %v48 = vld [vmem:[%s2 + $0x8] sm:$0xff]
  %v49 = vld [vmem:[%s2 + $0x10] sm:$0xff]
  %v50 = vld [vmem:[%s2 + $0x18] sm:$0xff]
  %v51 = vld [vmem:[%s2 + $0x20] sm:$0xff]
  %v52 = vld [vmem:[%s2 + $0x28] sm:$0xff]
  %v53 = vld [vmem:[%s2 + $0x30] sm:$0xff]
  %v54 = vld [vmem:[%s2 + $0x38] sm:$0xff]
  %v55 = vld [vmem:[%s2 + $0x40] sm:$0xff]
  %v56 = vld [vmem:[%s2 + $0x48] sm:$0xff]
  %v57 = vld [vmem:[%s2 + $0x50] sm:$0xff]
  %v58 = vld [vmem:[%s2 + $0x58] sm:$0xff]
  %v59 = vld [vmem:[%s2 + $0x60] sm:$0xff]
  %v60 = vld [vmem:[%s2 + $0x68] sm:$0xff]
  %v61 = vld [vmem:[%s2 + $0x70] sm:$0xff]
  %v62 = vld [vmem:[%s2 + $0x78] sm:$0xff]
  %v63 = vld [vmem:[%s0] sm:$0xff]
  %v64 = vld [vmem:[%s0 + $0x8] sm:$0xff]
  %v65 = vld [vmem:[%s0 + $0x10] sm:$0xff]
  %v66 = vld [vmem:[%s0 + $0x18] sm:$0xff]
  %v67 = vld [vmem:[%s0 + $0x20] sm:$0xff]
  %v68 = vld [vmem:[%s0 + $0x28] sm:$0xff]
  %v69 = vld [vmem:[%s0 + $0x30] sm:$0xff]
  %v70 = vld [vmem:[%s0 + $0x38] sm:$0xff]
  %v71 = vld [vmem:[%s3] sm:$0xff]
  %v72 = vld [vmem:[%s3 + $0x8] sm:$0xff]
  %v73 = vld [vmem:[%s3 + $0x10] sm:$0xff]
  %v74 = vld [vmem:[%s3 + $0x18] sm:$0xff]
  %v75 = vld [vmem:[%s3 + $0x20] sm:$0xff]
  %v76 = vld [vmem:[%s3 + $0x28] sm:$0xff]
  %v77 = vld [vmem:[%s3 + $0x30] sm:$0xff]
  %v78 = vld [vmem:[%s3 + $0x38] sm:$0xff]
  %v79 = vld [vmem:[%s3 + $0x40] sm:$0xff]
  %v80 = vld [vmem:[%s3 + $0x48] sm:$0xff]
  %v81 = vld [vmem:[%s3 + $0x50] sm:$0xff]
  %v82 = vld [vmem:[%s3 + $0x58] sm:$0xff]
  %v83 = vld [vmem:[%s3 + $0x60] sm:$0xff]
  %v84 = vld [vmem:[%s3 + $0x68] sm:$0xff]
  %v85 = vld [vmem:[%s3 + $0x70] sm:$0xff]
  %v86 = vld [vmem:[%s3 + $0x78] sm:$0xff]
  %88 = vset.pattern.permute.xlu0 0
  %89 = vperm.xlu0 %88, %v71
  %v90 = vpop.permute.xlu0 %89
  %93 = vset.pattern.permute.xlu0 0
  %94 = vperm.xlu0 %93, %v72
  %v95 = vpop.permute.xlu0 %94
  %98 = vset.pattern.permute.xlu0 0
  %99 = vperm.xlu0 %98, %v73
  %v100 = vpop.permute.xlu0 %99
  %103 = vset.pattern.permute.xlu0 0
  %104 = vperm.xlu0 %103, %v74
  %v105 = vpop.permute.xlu0 %104
  %108 = vset.pattern.permute.xlu0 0
  %109 = vperm.xlu0 %108, %v75
  %v110 = vpop.permute.xlu0 %109
  %113 = vset.pattern.permute.xlu0 0
  %114 = vperm.xlu0 %113, %v76
  %v115 = vpop.permute.xlu0 %114
  %118 = vset.pattern.permute.xlu0 0
  %119 = vperm.xlu0 %118, %v77
  %v120 = vpop.permute.xlu0 %119
  %123 = vset.pattern.permute.xlu0 0
  %124 = vperm.xlu0 %123, %v78
  %v125 = vpop.permute.xlu0 %124
  %128 = vset.pattern.permute.xlu0 0
  %129 = vperm.xlu0 %128, %v79
  %v130 = vpop.permute.xlu0 %129
  %133 = vset.pattern.permute.xlu0 0
  %134 = vperm.xlu0 %133, %v80
  %v135 = vpop.permute.xlu0 %134
  %138 = vset.pattern.permute.xlu0 0
  %139 = vperm.xlu0 %138, %v81
  %v140 = vpop.permute.xlu0 %139
  %143 = vset.pattern.permute.xlu0 0
  %144 = vperm.xlu0 %143, %v82
  %v145 = vpop.permute.xlu0 %144
  %148 = vset.pattern.permute.xlu0 0
  %149 = vperm.xlu0 %148, %v83
  %v150 = vpop.permute.xlu0 %149
  %153 = vset.pattern.permute.xlu0 0
  %154 = vperm.xlu0 %153, %v84
  %v155 = vpop.permute.xlu0 %154
  %158 = vset.pattern.permute.xlu0 0
  %159 = vperm.xlu0 %158, %v85
  %v160 = vpop.permute.xlu0 %159
  %163 = vset.pattern.permute.xlu0 0
  %164 = vperm.xlu0 %163, %v86
  %v165 = vpop.permute.xlu0 %164
  %vm167 = vcmask 523264
  %v169 = vsel %vm167, %v47, 0
  %v172 = vsel %vm167, %v48, 0
  %v175 = vsel %vm167, %v49, 0
  %v178 = vsel %vm167, %v50, 0
  %v181 = vsel %vm167, %v51, 0
  %v184 = vsel %vm167, %v52, 0
  %v187 = vsel %vm167, %v53, 0
  %v190 = vsel %vm167, %v54, 0
  %v193 = vsel %vm167, %v55, 0
  %v196 = vsel %vm167, %v56, 0
  %v199 = vsel %vm167, %v57, 0
  %v202 = vsel %vm167, %v58, 0
  %v205 = vsel %vm167, %v59, 0
  %v208 = vsel %vm167, %v60, 0
  %v211 = vsel %vm167, %v61, 0
  %v214 = vsel %vm167, %v62, 0
  %216 = vmatprep.subr.mxu0 0.0
  %217 = vmatpush1.msra.mxu0 0.0
  %218 = vmatprep.subr.mxu0 0.0
  %219 = vmatpush1.msra.mxu0 0.0
  %220 = vmatprep.subr.mxu0 0.0
  %221 = vmatpush1.msra.mxu0 0.0
  %222 = vmatprep.subr.mxu0 0.0
  %223 = vmatpush1.msra.mxu0 0.0
  %224 = vmatprep.subr.mxu0 0.0
  %225 = vmatpush1.msra.mxu0 0.0
  %226 = vmatprep.subr.mxu0 0.0
  %227 = vmatpush1.msra.mxu0 0.0
  %228 = vmatprep.subr.mxu0 0.0
  %229 = vmatpush1.msra.mxu0 0.0
  %230 = vmatprep.subr.mxu0 0.0
  %231 = vmatpush1.msra.mxu0 0.0
  %232 = vmatprep.subr.mxu0 0.0
  %233 = vmatpush1.msra.mxu0 %v70
  %234 = vmatprep.subr.mxu0 0.0
  %235 = vmatpush1.msra.mxu0 %v69
  %236 = vmatprep.subr.mxu0 0.0
  %237 = vmatpush1.msra.mxu0 %v68
  %238 = vmatprep.subr.mxu0 0.0
  %239 = vmatpush1.msra.mxu0 %v67
  %240 = vmatprep.subr.mxu0 0.0
  %241 = vmatpush1.msra.mxu0 %v66
  %242 = vmatprep.subr.mxu0 0.0
  %243 = vmatpush1.msra.mxu0 %v65
  %244 = vmatprep.subr.mxu0 0.0
  %245 = vmatpush1.msra.mxu0 %v64
  %246 = vmatprep.subr.mxu0 0.0
  %247 = vmatpush1.msra.mxu0 %v63
  %248 = vmatprep.subr.mxu0 0.0
  %249 = vmatpush2.msra.mxu0 0.0
  %250 = vmatprep.subr.mxu0 0.0
  %251 = vmatpush2.msra.mxu0 0.0
  %252 = vmatprep.subr.mxu0 0.0
  %253 = vmatpush2.msra.mxu0 0.0
  %254 = vmatprep.subr.mxu0 0.0
  %255 = vmatpush2.msra.mxu0 0.0
  %256 = vmatprep.subr.mxu0 0.0
  %257 = vmatpush2.msra.mxu0 0.0
  %258 = vmatprep.subr.mxu0 0.0
  %259 = vmatpush2.msra.mxu0 0.0
  %260 = vmatprep.subr.mxu0 0.0
  %261 = vmatpush2.msra.mxu0 0.0
  %262 = vmatprep.subr.mxu0 0.0
  %263 = vmatpush2.msra.mxu0 0.0
  %264 = vmatprep.subr.mxu0 0.0
  %265 = vmatpush2.msra.mxu0 0.0
  %266 = vmatprep.subr.mxu0 0.0
  %267 = vmatpush2.msra.mxu0 0.0
  %268 = vmatprep.subr.mxu0 0.0
  %269 = vmatpush2.msra.mxu0 0.0
  %270 = vmatprep.subr.mxu0 0.0
  %271 = vmatpush2.msra.mxu0 0.0
  %272 = vmatprep.subr.mxu0 0.0
  %273 = vmatpush2.msra.mxu0 0.0
  %274 = vmatprep.subr.mxu0 0.0
  %275 = vmatpush2.msra.mxu0 0.0
  %276 = vmatprep.subr.mxu0 0.0
  %277 = vmatpush2.msra.mxu0 0.0
  %278 = vmatprep.subr.mxu0 0.0
  %279 = vmatpush2.msra.mxu0 0.0
  %280 = vmatprep.mubr.f32.mxu0 0.0
  %281 = vmatmul.mubr.f32.gmra.mxu0 %v169
  %v282 = vpop.f32.mrf.mxu0
  %v283 = vadd.f32 %v90, %v282
  %v284 = vpop.f32.mrf.mxu0
  %285 = vmatprep.mubr.f32.mxu0 0.0
  %286 = vmatmul.mubr.f32.gmra.mxu0 %v172
  %v287 = vpop.f32.mrf.mxu0
  %v288 = vadd.f32 %v95, %v287
  %v289 = vpop.f32.mrf.mxu0
  %290 = vmatprep.mubr.f32.mxu0 0.0
  %291 = vmatmul.mubr.f32.gmra.mxu0 %v175
  %v292 = vpop.f32.mrf.mxu0
  %v293 = vadd.f32 %v100, %v292
  %v294 = vpop.f32.mrf.mxu0
  %295 = vmatprep.mubr.f32.mxu0 0.0
  %296 = vmatmul.mubr.f32.gmra.mxu0 %v178
  %v297 = vpop.f32.mrf.mxu0
  %v298 = vadd.f32 %v105, %v297
  %v299 = vpop.f32.mrf.mxu0
  %300 = vmatprep.mubr.f32.mxu0 0.0
  %301 = vmatmul.mubr.f32.gmra.mxu0 %v181
  %v302 = vpop.f32.mrf.mxu0
  %v303 = vadd.f32 %v110, %v302
  %v304 = vpop.f32.mrf.mxu0
  %305 = vmatprep.mubr.f32.mxu0 0.0
  %306 = vmatmul.mubr.f32.gmra.mxu0 %v184
  %v307 = vpop.f32.mrf.mxu0
  %v308 = vadd.f32 %v115, %v307
  %v309 = vpop.f32.mrf.mxu0
  %310 = vmatprep.mubr.f32.mxu0 0.0
  %311 = vmatmul.mubr.f32.gmra.mxu0 %v187
  %v312 = vpop.f32.mrf.mxu0
  %v313 = vadd.f32 %v120, %v312
  %v314 = vpop.f32.mrf.mxu0
  %315 = vmatprep.mubr.f32.mxu0 0.0
  %316 = vmatmul.mubr.f32.gmra.mxu0 %v190
  %v317 = vpop.f32.mrf.mxu0
  %v318 = vadd.f32 %v125, %v317
  %v319 = vpop.f32.mrf.mxu0
  %320 = vmatprep.mubr.f32.mxu0 0.0
  %321 = vmatmul.mubr.f32.gmra.mxu0 %v193
  %v322 = vpop.f32.mrf.mxu0
  %v323 = vadd.f32 %v130, %v322
  %v324 = vpop.f32.mrf.mxu0
  %325 = vmatprep.mubr.f32.mxu0 0.0
  %326 = vmatmul.mubr.f32.gmra.mxu0 %v196
  %v327 = vpop.f32.mrf.mxu0
  %v328 = vadd.f32 %v135, %v327
  %v329 = vpop.f32.mrf.mxu0
  %330 = vmatprep.mubr.f32.mxu0 0.0
  %331 = vmatmul.mubr.f32.gmra.mxu0 %v199
  %v332 = vpop.f32.mrf.mxu0
  %v333 = vadd.f32 %v140, %v332
  %v334 = vpop.f32.mrf.mxu0
  %335 = vmatprep.mubr.f32.mxu0 0.0
  %336 = vmatmul.mubr.f32.gmra.mxu0 %v202
  %v337 = vpop.f32.mrf.mxu0
  %v338 = vadd.f32 %v145, %v337
  %v339 = vpop.f32.mrf.mxu0
  %340 = vmatprep.mubr.f32.mxu0 0.0
  %341 = vmatmul.mubr.f32.gmra.mxu0 %v205
  %v342 = vpop.f32.mrf.mxu0
  %v343 = vadd.f32 %v150, %v342
  %v344 = vpop.f32.mrf.mxu0
  %345 = vmatprep.mubr.f32.mxu0 0.0
  %346 = vmatmul.mubr.f32.gmra.mxu0 %v208
  %v347 = vpop.f32.mrf.mxu0
  %v348 = vadd.f32 %v155, %v347
  %v349 = vpop.f32.mrf.mxu0
  %350 = vmatprep.mubr.f32.mxu0 0.0
  %351 = vmatmul.mubr.f32.gmra.mxu0 %v211
  %v352 = vpop.f32.mrf.mxu0
  %v353 = vadd.f32 %v160, %v352
  %v354 = vpop.f32.mrf.mxu0
  %355 = vmatprep.mubr.f32.mxu0 0.0
  %356 = vmatmul.mubr.f32.gmra.mxu0 %v214
  %v357 = vpop.f32.mrf.mxu0
  %v358 = vadd.f32 %v165, %v357
  %v359 = vpop.f32.mrf.mxu0
  %360 = vdwg.mxu0
  %v369 = vunpack.c.l.b16 %v39
  %v370 = vunpack.c.l.b16 %v40
  %v371 = vunpack.c.l.b16 %v41
  %v372 = vunpack.c.l.b16 %v42
  %v373 = vunpack.c.l.b16 %v43
  %v374 = vunpack.c.l.b16 %v44
  %v375 = vunpack.c.l.b16 %v45
  %v376 = vunpack.c.l.b16 %v46
  %v377 = vpack.c.b16 %v370, %v369
  %v378 = vpack.c.b16 %v372, %v371
  %v379 = vpack.c.b16 %v374, %v373
  %v380 = vpack.c.b16 %v376, %v375
  %385 = vmatprep.subr.bf16.mxu0 0
  %386 = vmatpush1.bf16.xpose.msra.mxu0 0
  %387 = vmatprep.subr.bf16.mxu0 0
  %388 = vmatpush1.bf16.xpose.msra.mxu0 0
  %389 = vmatprep.subr.bf16.mxu0 0
  %390 = vmatpush1.bf16.xpose.msra.mxu0 0
  %391 = vmatprep.subr.bf16.mxu0 0
  %392 = vmatpush1.bf16.xpose.msra.mxu0 0
  %393 = vmatprep.subr.bf16.mxu0 0
  %394 = vmatpush1.bf16.xpose.msra.mxu0 %v380
  %395 = vmatprep.subr.bf16.mxu0 0
  %396 = vmatpush1.bf16.xpose.msra.mxu0 %v379
  %397 = vmatprep.subr.bf16.mxu0 0
  %398 = vmatpush1.bf16.xpose.msra.mxu0 %v378
  %399 = vmatprep.subr.bf16.mxu0 0
  %400 = vmatpush1.bf16.xpose.msra.mxu0 %v377
  %401 = vmatprep.subr.bf16.mxu0 0
  %402 = vmatpush2.bf16.xpose.msra.mxu0 0
  %403 = vmatprep.subr.bf16.mxu0 0
  %404 = vmatpush2.bf16.xpose.msra.mxu0 0
  %405 = vmatprep.subr.bf16.mxu0 0
  %406 = vmatpush2.bf16.xpose.msra.mxu0 0
  %407 = vmatprep.subr.bf16.mxu0 0
  %408 = vmatpush2.bf16.xpose.msra.mxu0 0
  %409 = vmatprep.subr.bf16.mxu0 0
  %410 = vmatpush2.bf16.xpose.msra.mxu0 0
  %411 = vmatprep.subr.bf16.mxu0 0
  %412 = vmatpush2.bf16.xpose.msra.mxu0 0
  %413 = vmatprep.subr.bf16.mxu0 0
  %414 = vmatpush2.bf16.xpose.msra.mxu0 0
  %415 = vmatprep.subr.bf16.mxu0 0
  %416 = vmatpush2.bf16.xpose.msra.mxu0 0
  %417 = vmatprep.mubr.bf16.mxu0 0
  %418 = vmatmul.mubr.bf16.gmra.mxu0 1065369472
  %v419 = vpop.f32.mrf.mxu0
  %v420 = vadd.f32 0.0, %v419
  %v421 = vpop.f32.mrf.mxu0
  %v422 = vpop.f32.mrf.mxu0
  %v423 = vpop.f32.mrf.mxu0
  %424 = vdwg.mxu0
  %v425 = vlaneseq
  %v426 = vshrl.u32 %v425, 7
  %v427 = vadd.s32 %v426, 8
  %v428 = vadd.s32 %v426, 16
  %v429 = vadd.s32 %v426, 24
  %v430 = vadd.s32 %v426, 32
  %v431 = vadd.s32 %v426, 40
  %v432 = vadd.s32 %v426, 48
  %v433 = vadd.s32 %v426, 56
  %v434 = vadd.s32 %v426, 64
  %v435 = vadd.s32 %v426, 72
  %v436 = vadd.s32 %v426, 80
  %v437 = vadd.s32 %v426, 88
  %v438 = vadd.s32 %v426, 96
  %v439 = vadd.s32 %v426, 104
  %v440 = vadd.s32 %v426, 112
  %v441 = vadd.s32 %v426, 120
  %vm442 = vcmp.eq.s32.totalorder %v426, 126
  %vm443 = vcmp.eq.s32.totalorder %v427, 126
  %vm444 = vcmp.eq.s32.totalorder %v428, 126
  %vm445 = vcmp.eq.s32.totalorder %v429, 126
  %vm446 = vcmp.eq.s32.totalorder %v430, 126
  %vm447 = vcmp.eq.s32.totalorder %v431, 126
  %vm448 = vcmp.eq.s32.totalorder %v432, 126
  %vm449 = vcmp.eq.s32.totalorder %v433, 126
  %vm450 = vcmp.eq.s32.totalorder %v434, 126
  %vm451 = vcmp.eq.s32.totalorder %v435, 126
  %vm452 = vcmp.eq.s32.totalorder %v436, 126
  %vm453 = vcmp.eq.s32.totalorder %v437, 126
  %vm454 = vcmp.eq.s32.totalorder %v438, 126
  %vm455 = vcmp.eq.s32.totalorder %v439, 126
  %vm456 = vcmp.eq.s32.totalorder %v440, 126
  %vm457 = vcmp.eq.s32.totalorder %v441, 126
  %v458 = vlaneseq
  %v459 = vshrl.u32 %v458, 7
  %v460 = vsub.s32 0, %v459
  %v461 = vrot.slane %v420, %v460
  %v462 = vsel %vm442, %v461, %v283
  %v463 = vsel %vm443, %v461, %v288
  %v464 = vsel %vm444, %v461, %v293
  %v465 = vsel %vm445, %v461, %v298
  %v466 = vsel %vm446, %v461, %v303
  %v467 = vsel %vm447, %v461, %v308
  %v468 = vsel %vm448, %v461, %v313
  %v469 = vsel %vm449, %v461, %v318
  %v470 = vsel %vm450, %v461, %v323
  %v471 = vsel %vm451, %v461, %v328
  %v472 = vsel %vm452, %v461, %v333
  %v473 = vsel %vm453, %v461, %v338
  %v474 = vsel %vm454, %v461, %v343
  %v475 = vsel %vm455, %v461, %v348
  %v476 = vsel %vm456, %v461, %v353
  %v477 = vsel %vm457, %v461, %v358
  %vm478 = vcmp.eq.s32.totalorder %v426, 127
  %vm479 = vcmp.eq.s32.totalorder %v427, 127
  %vm480 = vcmp.eq.s32.totalorder %v428, 127
  %vm481 = vcmp.eq.s32.totalorder %v429, 127
  %vm482 = vcmp.eq.s32.totalorder %v430, 127
  %vm483 = vcmp.eq.s32.totalorder %v431, 127
  %vm484 = vcmp.eq.s32.totalorder %v432, 127
  %vm485 = vcmp.eq.s32.totalorder %v433, 127
  %vm486 = vcmp.eq.s32.totalorder %v434, 127
  %vm487 = vcmp.eq.s32.totalorder %v435, 127
  %vm488 = vcmp.eq.s32.totalorder %v436, 127
  %vm489 = vcmp.eq.s32.totalorder %v437, 127
  %vm490 = vcmp.eq.s32.totalorder %v438, 127
  %vm491 = vcmp.eq.s32.totalorder %v439, 127
  %vm492 = vcmp.eq.s32.totalorder %v440, 127
  %vm493 = vcmp.eq.s32.totalorder %v441, 127
  %v494 = vsel %vm478, 1.0, %v462
  %v495 = vsel %vm479, 1.0, %v463
  %v496 = vsel %vm480, 1.0, %v464
  %v497 = vsel %vm481, 1.0, %v465
  %v498 = vsel %vm482, 1.0, %v466
  %v499 = vsel %vm483, 1.0, %v467
  %v500 = vsel %vm484, 1.0, %v468
  %v501 = vsel %vm485, 1.0, %v469
  %v502 = vsel %vm486, 1.0, %v470
  %v503 = vsel %vm487, 1.0, %v471
  %v504 = vsel %vm488, 1.0, %v472
  %v505 = vsel %vm489, 1.0, %v473
  %v506 = vsel %vm490, 1.0, %v474
  %v507 = vsel %vm491, 1.0, %v475
  %v508 = vsel %vm492, 1.0, %v476
  %v509 = vsel %vm493, 1.0, %v477
  %v510 = vld [vmem:[#allocation2] sm:$0xff]
  %v511 = vld [vmem:[#allocation2 + $0x8] sm:$0xff]
  %v512 = vld [vmem:[#allocation2 + $0x10] sm:$0xff]
  %v513 = vld [vmem:[#allocation2 + $0x18] sm:$0xff]
  %v514 = vld [vmem:[#allocation2 + $0x20] sm:$0xff]
  %v515 = vld [vmem:[#allocation2 + $0x28] sm:$0xff]
  %v516 = vld [vmem:[#allocation2 + $0x30] sm:$0xff]
  %v517 = vld [vmem:[#allocation2 + $0x38] sm:$0xff]
  %v518 = vld [vmem:[#allocation2 + $0x40] sm:$0xff]
  %v519 = vld [vmem:[#allocation2 + $0x48] sm:$0xff]
  %v520 = vld [vmem:[#allocation2 + $0x50] sm:$0xff]
  %v521 = vld [vmem:[#allocation2 + $0x58] sm:$0xff]
  %v522 = vld [vmem:[#allocation2 + $0x60] sm:$0xff]
  %v523 = vld [vmem:[#allocation2 + $0x68] sm:$0xff]
  %v524 = vld [vmem:[#allocation2 + $0x70] sm:$0xff]
  %v525 = vld [vmem:[#allocation2 + $0x78] sm:$0xff]
  %v526 = vpack.c.bf16 %v495, %v494
  %v527 = vpack.c.bf16 %v497, %v496
  %v528 = vpack.c.bf16 %v499, %v498
  %v529 = vpack.c.bf16 %v501, %v500
  %v530 = vpack.c.bf16 %v503, %v502
  %v531 = vpack.c.bf16 %v505, %v504
  %v532 = vpack.c.bf16 %v507, %v506
  %v533 = vpack.c.bf16 %v509, %v508
  %v535 = vsel %vm167, %v526, 0
  %v538 = vsel %vm167, %v527, 0
  %v541 = vsel %vm167, %v528, 0
  %v544 = vsel %vm167, %v529, 0
  %v547 = vsel %vm167, %v530, 0
  %v550 = vsel %vm167, %v531, 0
  %v553 = vsel %vm167, %v532, 0
  %v556 = vsel %vm167, %v533, 0
  %558 = vmatprep.subr.bf16.mxu0 0
  %559 = vmatpush1.bf16.msra.mxu0 0
  %560 = vmatprep.subr.bf16.mxu0 0
  %561 = vmatpush1.bf16.msra.mxu0 0
  %562 = vmatprep.subr.bf16.mxu0 0
  %563 = vmatpush1.bf16.msra.mxu0 0
  %564 = vmatprep.subr.bf16.mxu0 0
  %565 = vmatpush1.bf16.msra.mxu0 0
  %566 = vmatprep.subr.bf16.mxu0 0
  %567 = vmatpush1.bf16.msra.mxu0 %v380
  %568 = vmatprep.subr.bf16.mxu0 0
  %569 = vmatpush1.bf16.msra.mxu0 %v379
  %570 = vmatprep.subr.bf16.mxu0 0
  %571 = vmatpush1.bf16.msra.mxu0 %v378
  %572 = vmatprep.subr.bf16.mxu0 0
  %573 = vmatpush1.bf16.msra.mxu0 %v377
  %574 = vmatprep.subr.bf16.mxu0 0
  %575 = vmatpush2.bf16.msra.mxu0 0
  %576 = vmatprep.subr.bf16.mxu0 0
  %577 = vmatpush2.bf16.msra.mxu0 0
  %578 = vmatprep.subr.bf16.mxu0 0
  %579 = vmatpush2.bf16.msra.mxu0 0
  %580 = vmatprep.subr.bf16.mxu0 0
  %581 = vmatpush2.bf16.msra.mxu0 0
  %582 = vmatprep.subr.bf16.mxu0 0
  %583 = vmatpush2.bf16.msra.mxu0 0
  %584 = vmatprep.subr.bf16.mxu0 0
  %585 = vmatpush2.bf16.msra.mxu0 0
  %586 = vmatprep.subr.bf16.mxu0 0
  %587 = vmatpush2.bf16.msra.mxu0 0
  %588 = vmatprep.subr.bf16.mxu0 0
  %589 = vmatpush2.bf16.msra.mxu0 0
  %590 = vmatprep.mubr.bf16.mxu0 0
  %591 = vmatmul.mubr.bf16.gmra.mxu0 %v535
  %v592 = vpop.f32.mrf.mxu0
  %v593 = vadd.f32 0.0, %v592
  %v594 = vpop.f32.mrf.mxu0
  %v595 = vpop.f32.mrf.mxu0
  %v596 = vadd.f32 0.0, %v595
  %v597 = vpop.f32.mrf.mxu0
  %598 = vmatprep.mubr.bf16.mxu0 0
  %599 = vmatmul.mubr.bf16.gmra.mxu0 %v538
  %v600 = vpop.f32.mrf.mxu0
  %v601 = vadd.f32 0.0, %v600
  %v602 = vpop.f32.mrf.mxu0
  %v603 = vpop.f32.mrf.mxu0
  %v604 = vadd.f32 0.0, %v603
  %v605 = vpop.f32.mrf.mxu0
  %606 = vmatprep.mubr.bf16.mxu0 0
  %607 = vmatmul.mubr.bf16.gmra.mxu0 %v541
  %v608 = vpop.f32.mrf.mxu0
  %v609 = vadd.f32 0.0, %v608
  %v610 = vpop.f32.mrf.mxu0
  %v611 = vpop.f32.mrf.mxu0
  %v612 = vadd.f32 0.0, %v611
  %v613 = vpop.f32.mrf.mxu0
  %614 = vmatprep.mubr.bf16.mxu0 0
  %615 = vmatmul.mubr.bf16.gmra.mxu0 %v544
  %v616 = vpop.f32.mrf.mxu0
  %v617 = vadd.f32 0.0, %v616
  %v618 = vpop.f32.mrf.mxu0
  %v619 = vpop.f32.mrf.mxu0
  %v620 = vadd.f32 0.0, %v619
  %v621 = vpop.f32.mrf.mxu0
  %622 = vmatprep.mubr.bf16.mxu0 0
  %623 = vmatmul.mubr.bf16.gmra.mxu0 %v547
  %v624 = vpop.f32.mrf.mxu0
  %v625 = vadd.f32 0.0, %v624
  %v626 = vpop.f32.mrf.mxu0
  %v627 = vpop.f32.mrf.mxu0
  %v628 = vadd.f32 0.0, %v627
  %v629 = vpop.f32.mrf.mxu0
  %630 = vmatprep.mubr.bf16.mxu0 0
  %631 = vmatmul.mubr.bf16.gmra.mxu0 %v550
  %v632 = vpop.f32.mrf.mxu0
  %v633 = vadd.f32 0.0, %v632
  %v634 = vpop.f32.mrf.mxu0
  %v635 = vpop.f32.mrf.mxu0
  %v636 = vadd.f32 0.0, %v635
  %v637 = vpop.f32.mrf.mxu0
  %638 = vmatprep.mubr.bf16.mxu0 0
  %639 = vmatmul.mubr.bf16.gmra.mxu0 %v553
  %v640 = vpop.f32.mrf.mxu0
  %v641 = vadd.f32 0.0, %v640
  %v642 = vpop.f32.mrf.mxu0
  %v643 = vpop.f32.mrf.mxu0
  %v644 = vadd.f32 0.0, %v643
  %v645 = vpop.f32.mrf.mxu0
  %646 = vmatprep.mubr.bf16.mxu0 0
  %647 = vmatmul.mubr.bf16.gmra.mxu0 %v556
  %v648 = vpop.f32.mrf.mxu0
  %v649 = vadd.f32 0.0, %v648
  %v650 = vpop.f32.mrf.mxu0
  %v651 = vpop.f32.mrf.mxu0
  %v652 = vadd.f32 0.0, %v651
  %v653 = vpop.f32.mrf.mxu0
  %654 = vdwg.mxu0
  %v655 = vadd.f32 %v510, %v593
  %v656 = vadd.f32 %v511, %v596
  %v657 = vadd.f32 %v512, %v601
  %v658 = vadd.f32 %v513, %v604
  %v659 = vadd.f32 %v514, %v609
  %v660 = vadd.f32 %v515, %v612
  %v661 = vadd.f32 %v516, %v617
  %v662 = vadd.f32 %v517, %v620
  %v663 = vadd.f32 %v518, %v625
  %v664 = vadd.f32 %v519, %v628
  %v665 = vadd.f32 %v520, %v633
  %v666 = vadd.f32 %v521, %v636
  %v667 = vadd.f32 %v522, %v641
  %v668 = vadd.f32 %v523, %v644
  %v669 = vadd.f32 %v524, %v649
  %v670 = vadd.f32 %v525, %v652
  %671 = vst [vmem:[#allocation2] sm:$0xff] %v655
  %672 = vst [vmem:[#allocation2 + $0x8] sm:$0xff] %v656
  %673 = vst [vmem:[#allocation2 + $0x10] sm:$0xff] %v657
  %674 = vst [vmem:[#allocation2 + $0x18] sm:$0xff] %v658
  %675 = vst [vmem:[#allocation2 + $0x20] sm:$0xff] %v659
  %676 = vst [vmem:[#allocation2 + $0x28] sm:$0xff] %v660
  %677 = vst [vmem:[#allocation2 + $0x30] sm:$0xff] %v661
  %678 = vst [vmem:[#allocation2 + $0x38] sm:$0xff] %v662
  %679 = vst [vmem:[#allocation2 + $0x40] sm:$0xff] %v663
  %680 = vst [vmem:[#allocation2 + $0x48] sm:$0xff] %v664
  %681 = vst [vmem:[#allocation2 + $0x50] sm:$0xff] %v665
  %682 = vst [vmem:[#allocation2 + $0x58] sm:$0xff] %v666
  %683 = vst [vmem:[#allocation2 + $0x60] sm:$0xff] %v667
  %684 = vst [vmem:[#allocation2 + $0x68] sm:$0xff] %v668
  %685 = vst [vmem:[#allocation2 + $0x70] sm:$0xff] %v669
  %686 = vst [vmem:[#allocation2 + $0x78] sm:$0xff] %v670
  // Predicated region
  $region22: #{hypergraph_conv.2} parent=0 // pred_check
    %p687 = pneg %p19
  $region23: #{hypergraph_conv.2} parent=0 // pred_check_branch
    %689 = sbr.rel (%p687) target = $region25
  $region24: #{hypergraph_conv.2} parent=0 // pred_region
    %v690 = vld [vmem:[#allocation2 + $0x7e] sm:$0x1]
    %v691 = vld [vmem:[#allocation2 + $0x7f] sm:$0x1]
    %vm692 = vcmp.gt.f32.partialorder %v691, 0.0
    %v693 = vrcp.pop %v691
    %v694 = vmul.f32 1.0, %v693
    %v695 = vsel %vm692, %v694, 0.0
    %v696 = vadd.f32 %v691, 1.0
    %v697 = vrcp.pop %v696
    %v698 = vmul.f32 %v690, %v697
    %vm699 = vcmp.gt.f32.partialorder %v698, 0.0
    %v700 = vrsqrt.pop %v698
    %v701 = vsel %vm699, %v700, 1.0
    %v702 = vmul.f32 %v695, %v701
    %vm703 = vcmp.lt.s32.totalorder %v426, 8
    %vm704 = vcmp.lt.s32.totalorder %v427, 8
    %vm705 = vcmp.lt.s32.totalorder %v428, 8
    %vm706 = vcmp.lt.s32.totalorder %v429, 8
    %vm707 = vcmp.lt.s32.totalorder %v430, 8
    %vm708 = vcmp.lt.s32.totalorder %v431, 8
    %vm709 = vcmp.lt.s32.totalorder %v432, 8
    %vm710 = vcmp.lt.s32.totalorder %v433, 8
    %vm711 = vcmp.lt.s32.totalorder %v434, 8
    %vm712 = vcmp.lt.s32.totalorder %v435, 8
    %vm713 = vcmp.lt.s32.totalorder %v436, 8
    %vm714 = vcmp.lt.s32.totalorder %v437, 8
    %vm715 = vcmp.lt.s32.totalorder %v438, 8
    %vm716 = vcmp.lt.s32.totalorder %v439, 8
    %vm717 = vcmp.lt.s32.totalorder %v440, 8
    %vm718 = vcmp.lt.s32.totalorder %v441, 8
    %v719 = vld [vmem:[#allocation2] sm:$0xff]
    %v720 = vld [vmem:[#allocation2 + $0x8] sm:$0xff]
    %v721 = vld [vmem:[#allocation2 + $0x10] sm:$0xff]
    %v722 = vld [vmem:[#allocation2 + $0x18] sm:$0xff]
    %v723 = vld [vmem:[#allocation2 + $0x20] sm:$0xff]
    %v724 = vld [vmem:[#allocation2 + $0x28] sm:$0xff]
    %v725 = vld [vmem:[#allocation2 + $0x30] sm:$0xff]
    %v726 = vld [vmem:[#allocation2 + $0x38] sm:$0xff]
    %v727 = vld [vmem:[#allocation2 + $0x40] sm:$0xff]
    %v728 = vld [vmem:[#allocation2 + $0x48] sm:$0xff]
    %v729 = vld [vmem:[#allocation2 + $0x50] sm:$0xff]
    %v730 = vld [vmem:[#allocation2 + $0x58] sm:$0xff]
    %v731 = vld [vmem:[#allocation2 + $0x60] sm:$0xff]
    %v732 = vld [vmem:[#allocation2 + $0x68] sm:$0xff]
    %v733 = vld [vmem:[#allocation2 + $0x70] sm:$0xff]
    %v734 = vld [vmem:[#allocation2 + $0x78] sm:$0xff]
    %v735 = vlaneseq
    %v736 = vshrl.u32 %v735, 7
    %v737 = vsub.s32 0, %v736
    %v738 = vrot.slane %v702, %v737
    %v739 = vmul.f32 %v719, %v738
    %v740 = vmul.f32 %v720, %v738
    %v741 = vmul.f32 %v721, %v738
    %v742 = vmul.f32 %v722, %v738
    %v743 = vmul.f32 %v723, %v738
    %v744 = vmul.f32 %v724, %v738
    %v745 = vmul.f32 %v725, %v738
    %v746 = vmul.f32 %v726, %v738
    %v747 = vmul.f32 %v727, %v738
    %v748 = vmul.f32 %v728, %v738
    %v749 = vmul.f32 %v729, %v738
    %v750 = vmul.f32 %v730, %v738
    %v751 = vmul.f32 %v731, %v738
    %v752 = vmul.f32 %v732, %v738
    %v753 = vmul.f32 %v733, %v738
    %v754 = vmul.f32 %v734, %v738
    %v755 = vsel %vm703, %v739, 0.0
    %v756 = vsel %vm704, %v740, 0.0
    %v757 = vsel %vm705, %v741, 0.0
    %v758 = vsel %vm706, %v742, 0.0
    %v759 = vsel %vm707, %v743, 0.0
    %v760 = vsel %vm708, %v744, 0.0
    %v761 = vsel %vm709, %v745, 0.0
    %v762 = vsel %vm710, %v746, 0.0
    %v763 = vsel %vm711, %v747, 0.0
    %v764 = vsel %vm712, %v748, 0.0
    %v765 = vsel %vm713, %v749, 0.0
    %v766 = vsel %vm714, %v750, 0.0
    %v767 = vsel %vm715, %v751, 0.0
    %v768 = vsel %vm716, %v752, 0.0
    %v769 = vsel %vm717, %v753, 0.0
    %v770 = vsel %vm718, %v754, 0.0
    %v771 = vsel %vm478, 1.0, %v755
    %v772 = vsel %vm479, 1.0, %v756
    %v773 = vsel %vm480, 1.0, %v757
    %v774 = vsel %vm481, 1.0, %v758
    %v775 = vsel %vm482, 1.0, %v759
    %v776 = vsel %vm483, 1.0, %v760
    %v777 = vsel %vm484, 1.0, %v761
    %v778 = vsel %vm485, 1.0, %v762
    %v779 = vsel %vm486, 1.0, %v763
    %v780 = vsel %vm487, 1.0, %v764
    %v781 = vsel %vm488, 1.0, %v765
    %v782 = vsel %vm489, 1.0, %v766
    %v783 = vsel %vm490, 1.0, %v767
    %v784 = vsel %vm491, 1.0, %v768
    %v785 = vsel %vm492, 1.0, %v769
    %v786 = vsel %vm493, 1.0, %v770
    %v787 = vpack.c.bf16 %v772, %v771
    %v788 = vpack.c.bf16 %v774, %v773
    %v789 = vpack.c.bf16 %v776, %v775
    %v790 = vpack.c.bf16 %v778, %v777
    %v791 = vpack.c.bf16 %v780, %v779
    %v792 = vpack.c.bf16 %v782, %v781
    %v793 = vpack.c.bf16 %v784, %v783
    %v794 = vpack.c.bf16 %v786, %v785
    %v803 = vunpack.c.l.b16 %v787
    %v804 = vunpack.c.h.b16 %v787
    %v805 = vunpack.c.l.b16 %v788
    %v806 = vunpack.c.h.b16 %v788
    %v807 = vunpack.c.l.b16 %v789
    %v808 = vunpack.c.h.b16 %v789
    %v809 = vunpack.c.l.b16 %v790
    %v810 = vunpack.c.h.b16 %v790
    %v811 = vunpack.c.l.b16 %v791
    %v812 = vunpack.c.h.b16 %v791
    %v813 = vunpack.c.l.b16 %v792
    %v814 = vunpack.c.h.b16 %v792
    %v815 = vunpack.c.l.b16 %v793
    %v816 = vunpack.c.h.b16 %v793
    %v817 = vunpack.c.l.b16 %v794
    %v818 = vunpack.c.h.b16 %v794
    %v819 = vpack.c.b16 %v803, %v803
    %v820 = vpack.c.b16 %v804, %v804
    %v821 = vpack.c.b16 %v805, %v805
    %v822 = vpack.c.b16 %v806, %v806
    %v823 = vpack.c.b16 %v807, %v807
    %v824 = vpack.c.b16 %v808, %v808
    %v825 = vpack.c.b16 %v809, %v809
    %v826 = vpack.c.b16 %v810, %v810
    %v827 = vpack.c.b16 %v811, %v811
    %v828 = vpack.c.b16 %v812, %v812
    %v829 = vpack.c.b16 %v813, %v813
    %v830 = vpack.c.b16 %v814, %v814
    %v831 = vpack.c.b16 %v815, %v815
    %v832 = vpack.c.b16 %v816, %v816
    %v833 = vpack.c.b16 %v817, %v817
    %v834 = vpack.c.b16 %v818, %v818
    %851 = vst [vmem:[%s4] sm:$0xf] %v819
    %852 = vst [vmem:[%s4 + $0x4] sm:$0xf] %v820
    %853 = vst [vmem:[%s4 + $0x8] sm:$0xf] %v821
    %854 = vst [vmem:[%s4 + $0xc] sm:$0xf] %v822
    %855 = vst [vmem:[%s4 + $0x10] sm:$0xf] %v823
    %856 = vst [vmem:[%s4 + $0x14] sm:$0xf] %v824
    %857 = vst [vmem:[%s4 + $0x18] sm:$0xf] %v825
    %858 = vst [vmem:[%s4 + $0x1c] sm:$0xf] %v826
    %859 = vst [vmem:[%s4 + $0x20] sm:$0xf] %v827
    %860 = vst [vmem:[%s4 + $0x24] sm:$0xf] %v828
    %861 = vst [vmem:[%s4 + $0x28] sm:$0xf] %v829
    %862 = vst [vmem:[%s4 + $0x2c] sm:$0xf] %v830
    %863 = vst [vmem:[%s4 + $0x30] sm:$0xf] %v831
    %864 = vst [vmem:[%s4 + $0x34] sm:$0xf] %v832
    %865 = vst [vmem:[%s4 + $0x38] sm:$0xf] %v833
    %866 = vst [vmem:[%s4 + $0x3c] sm:$0xf] %v834
  $region25: #{hypergraph_conv.2} parent=0 // pred_fallthru
    _
  // Predicated region
  $region26: #{hypergraph_conv.2} parent=0 // pred_check
    _
  $region27: #{hypergraph_conv.2} parent=0 // pred_check_branch
    %868 = sbr.rel (0) target = $region29
  $region28: #{hypergraph_conv.2} parent=0 // pred_region
    _
  $region29: #{hypergraph_conv.2} parent=0 // pred_fallthru
    _
  // Predicated region
  $region30: #{hypergraph_conv.2} parent=0 // pred_check
    _
  $region31: #{hypergraph_conv.2} parent=0 // pred_check_branch
    %870 = sbr.rel (0) target = $region33
  $region32: #{hypergraph_conv.2} parent=0 // pred_region
    _
  $region33: #{hypergraph_conv.2} parent=0 // pred_fallthru
    _

</llo_original>
